<compile_context>
chip_gen: v6e
topology: v6e:2x2x1
jax: 0.10.0
libtpu: 0.0.40
codegen_flags: <defaults>
</compile_context>

<pallas_src>
import functools

import jax
import jax.numpy as jnp
from jax.experimental import pallas as pl
from jax.experimental.pallas import tpu as pltpu


def _ce_modified_kernel(scale_ref, pred_ref, label_ref, *rest, n_rows,
                        ignore_index, has_class_weight):
    """Per-sample softmax cross entropy (class-weighted, ignore_index-aware).

    Refs (per (TN,)-tile of the N axis):
      scale_ref : (1, 1)  f32  SMEM   logit temperature
      pred_ref  : (TN, C) any  VMEM   raw cls scores (native dtype)
      label_ref : (TN, 1) i32  VMEM   target class indices
      cw_ref    : (1, C)  f32  VMEM   class weights (only if has_class_weight)
      loss_ref  : (TN, 1) f32  VMEM   per-sample loss (reduction='none')
    """
    if has_class_weight:
        cw_ref, loss_ref = rest
    else:
        (loss_ref,) = rest
        cw_ref = None

    tn, c = pred_ref.shape
    scale = scale_ref[0, 0]
    logits = pred_ref[...].astype(jnp.float32) * scale             # (TN, C)

    labels = label_ref[...]                                         # (TN, 1)
    valid = labels != ignore_index                                  # (TN, 1)
    if n_rows is not None:
        # The last tile extends past N: those VMEM rows were never DMA'd and
        # hold undefined data. All reductions below are per-row, so any NaN/Inf
        # from garbage stays confined to its own row and is dropped here.
        row = (pl.program_id(0) * tn
               + jax.lax.broadcasted_iota(jnp.int32, (tn, 1), 0))   # (TN, 1)
        valid = valid & (row < n_rows)

    # Numerically stable log-sum-exp over classes (per row).
    m = jnp.max(logits, axis=1, keepdims=True)                      # XLU
    lse = m + jnp.log(jnp.sum(jnp.exp(logits - m), axis=1, keepdims=True))

    # One-hot pick of logit[y] (and class_weight[y]) as masked lane-reductions.
    col = jax.lax.broadcasted_iota(jnp.int32, (tn, c), 1)           # (TN, C)
    onehot = col == labels                                          # (TN, C)
    picked = jnp.sum(jnp.where(onehot, logits, 0.0), axis=1, keepdims=True)

    # F.cross_entropy(..., weight=cw, reduction='none', ignore_index=ii):
    #   loss_i = cw[y_i] * (logsumexp_i - logit_i[y_i]), 0 for ignored rows.
    loss = lse - picked                                             # (TN, 1)
    if has_class_weight:
        picked_cw = jnp.sum(jnp.where(onehot, cw_ref[...], 0.0),
                            axis=1, keepdims=True)
        loss = picked_cw * loss

    # TODO(synk): labels outside [0, C) that are not ignore_index silently give
    # loss = 0 here, whereas PyTorch F.cross_entropy would raise.
    loss_ref[...] = jnp.where(valid, loss, 0.0)


def _round_up(x, m):
    return ((x + m - 1) // m) * m


def _vmem_limit_bytes():
    """Generation-aware scoped-VMEM limit (headroom below physical capacity)."""
    try:
        cap = int(pltpu.get_tpu_info().vmem_capacity_bytes)
    except Exception:
        cap = 64 * 1024 * 1024            # assume the smallest (v7x) if unknown
    # v5e/v6e (128 MiB physical) -> 64 MiB ; v7x (64 MiB physical) -> 40 MiB.
    return int(min(cap * 5 // 8, 64 * 1024 * 1024))


def _choose_tile_n(n, c, itemsize, vmem_limit):
    """Largest N-tile whose full working set fits comfortably in VMEM."""
    sub = max(8, 32 // max(itemsize, 1))   # sublane multiple: f32->8, bf16->16
    # Per tile row: double-buffered native-dtype pred block + ~4 live f32
    # (TN, C) temporaries (widened logits, exp, one-hot, select) + narrow
    # label/loss blocks.
    per_row = 2 * c * itemsize + 4 * c * 4 + 64
    tn = (vmem_limit // 2) // per_row
    # Keep the pred block itself in the ~2-4 MiB sweet spot: amortizes the
    # ~0.35 us/step overhead without blowing up code size / compile time.
    tn = min(tn, (4 * 1024 * 1024) // max(1, c * itemsize))
    tn = min(tn, 8192)
    # Keep >= 4 grid steps when the problem allows it (pipeline overlap and
    # megacore sharding of the "parallel" axis on v7x).
    tn = min(tn, _round_up(pl.cdiv(n, 4), sub))
    tn = min(tn, _round_up(n, sub))
    return max(sub, (tn // sub) * sub)


def _run_kernel(pred, logit_scale, label, class_weight, ignore_index):
    n, c = pred.shape
    itemsize = jnp.dtype(pred.dtype).itemsize
    vmem_limit = _vmem_limit_bytes()
    tn = _choose_tile_n(n, c, itemsize, vmem_limit)
    grid_n = pl.cdiv(n, tn)
    n_rows = None if n % tn == 0 else n     # static switch: mask tail rows only

    has_cw = class_weight is not None
    kernel = functools.partial(_ce_modified_kernel, n_rows=n_rows,
                               ignore_index=ignore_index,
                               has_class_weight=has_cw)

    in_specs = [
        # logit temperature: scalar in SMEM, untiled.
        pl.BlockSpec(memory_space=pltpu.MemorySpace.SMEM),
        # pred: (TN, C) tiles along N (native dtype; widened in-kernel).
        pl.BlockSpec((tn, c), lambda i: (i, 0)),
        # label: (TN, 1) tiles along N.
        pl.BlockSpec((tn, 1), lambda i: (i, 0)),
    ]
    args = [
        jnp.asarray(logit_scale, jnp.float32).reshape(1, 1),
        pred,
        label.astype(jnp.int32).reshape(n, 1),
    ]
    if has_cw:
        # class_weight: (1, C) block, same block every step -> VMEM-resident.
        in_specs.append(pl.BlockSpec((1, c), lambda i: (0, 0)))
        args.append(jnp.asarray(class_weight, jnp.float32).reshape(1, c))

    cost = pl.CostEstimate(
        flops=int(6 * n * c),
        transcendentals=int(n * c + n),
        bytes_accessed=int(n * c * itemsize + 8 * n + (4 * c if has_cw else 0) + 4),
    )

    per_sample = pl.pallas_call(
        kernel,
        out_shape=jax.ShapeDtypeStruct((n, 1), jnp.float32),
        grid=(grid_n,),
        in_specs=in_specs,
        out_specs=pl.BlockSpec((tn, 1), lambda i: (i, 0)),
        compiler_params=pltpu.CompilerParams(
            dimension_semantics=("parallel",),
            vmem_limit_bytes=vmem_limit,
        ),
        cost_estimate=cost,
    )(*args)
    return per_sample[:, 0]


class CrossEntropyLossModified:
    """JAX/Pallas port of mmdet's CrossEntropyLossModified (softmax path)."""

    def __init__(self, use_sigmoid=False, use_mask=False, reduction='mean',
                 class_weight=None, ignore_index=None, loss_weight=1.0):
        assert use_sigmoid is False and use_mask is False
        self.reduction = reduction
        self.loss_weight = float(loss_weight)
        self.class_weight = class_weight
        self.ignore_index = ignore_index

    def __call__(self, cls_score, logit_scale, label, ious, weight=None,
                 avg_factor=None, reduction_override=None, ignore_index=None):
        assert reduction_override in (None, 'none', 'mean', 'sum')
        reduction = reduction_override if reduction_override else self.reduction
        if ignore_index is None:
            ignore_index = self.ignore_index
        ignore_index = -100 if ignore_index is None else int(ignore_index)

        n, _ = cls_score.shape
        class_weight = (None if self.class_weight is None
                        else jnp.asarray(self.class_weight, jnp.float32))

        per_sample = _run_kernel(cls_score, logit_scale, label, class_weight,
                                 ignore_index)

        # cross_entropy_modified: loss *= ious ; weight_reduce_loss: loss *= w.
        # Applied here on the tiny (N,) vector; XLA fuses it into the reduction.
        per_sample = per_sample * jnp.asarray(ious, jnp.float32)
        if weight is not None:
            per_sample = per_sample * jnp.asarray(weight, jnp.float32)

        # weight_reduce_loss semantics (mmdet): 'mean' divides by N (or
        # avg_factor), not by the sum of weights.
        if avg_factor is None:
            if reduction == 'mean':
                loss = jnp.sum(per_sample) / n
            elif reduction == 'sum':
                loss = jnp.sum(per_sample)
            else:  # 'none'
                loss = per_sample
        else:
            if reduction == 'mean':
                loss = jnp.sum(per_sample) / avg_factor
            elif reduction == 'none':
                loss = per_sample
            else:
                raise ValueError('avg_factor can not be used with reduction="sum"')
        return self.loss_weight * loss


def _reference(cls_score, logit_scale, label, ious, weight, class_weight,
               ignore_index, reduction, loss_weight):
    logits = cls_score.astype(jnp.float32) * logit_scale
    logp = jax.nn.log_softmax(logits, axis=-1)
    safe_label = jnp.where(label == ignore_index, 0, label)
    picked = jnp.take_along_axis(logp, safe_label[:, None], axis=1)[:, 0]
    cw = (jnp.ones_like(picked) if class_weight is None
          else class_weight[safe_label])
    loss = jnp.where(label == ignore_index, 0.0, -picked * cw)
    loss = loss * ious
    if weight is not None:
        loss = loss * weight
    if reduction == 'mean':
        loss = loss.mean()
    elif reduction == 'sum':
        loss = loss.sum()
    return loss_weight * loss


if __name__ == "__main__":
    key = jax.random.PRNGKey(0)
    k1, k2, k3, k4, k5, k6 = jax.random.split(key, 6)

    # Case 1: class weights + ignore_index + sample weights, reduction='mean'.
    N, C = 8, 16
    cls_score = jax.random.normal(k1, (N, C), jnp.float32)
    logit_scale = jnp.float32(4.6052)   # e.g. exp(learned temperature)
    label = jax.random.randint(k2, (N,), 0, C, jnp.int32)
    label = label.at[3].set(-100)       # exercise ignore_index
    ious = jax.random.uniform(k3, (N,), jnp.float32)
    weight = jax.random.uniform(k4, (N,), jnp.float32, 0.5, 1.5)
    class_weight = jnp.linspace(0.5, 1.5, C, dtype=jnp.float32)

    loss_mod = CrossEntropyLossModified(reduction='mean',
                                        class_weight=class_weight,
                                        ignore_index=None, loss_weight=1.0)
    out = jax.block_until_ready(
        loss_mod(cls_score, logit_scale, label, ious, weight=weight))
    ref = _reference(cls_score, logit_scale, label, ious, weight, class_weight,
                     ignore_index=-100, reduction='mean', loss_weight=1.0)
    assert jnp.allclose(out, ref, rtol=1e-5, atol=1e-5), (out, ref)

    # Case 2: N not a multiple of the tile -> exercises in-kernel tail-row
    # masking (no pred padding); no class weights; reduction='none'.
    N2, C2 = 100, 16
    cls2 = jax.random.normal(k5, (N2, C2), jnp.float32)
    label2 = jax.random.randint(k6, (N2,), 0, C2, jnp.int32)
    ious2 = jnp.linspace(0.1, 1.0, N2, dtype=jnp.float32)
    loss_mod2 = CrossEntropyLossModified(reduction='mean', class_weight=None)
    out2 = jax.block_until_ready(
        loss_mod2(cls2, logit_scale, label2, ious2, reduction_override='none'))
    ref2 = _reference(cls2, logit_scale, label2, ious2, None, None,
                      ignore_index=-100, reduction='none', loss_weight=1.0)
    assert jnp.allclose(out2, ref2, rtol=1e-5, atol=1e-5)

    print("KERNEL_OK")
</pallas_src>

<mosaic_0001>
module attributes {stable_mosaic.version = 11 : i64} {
  func.func @_ce_modified_kernel(%arg0: i32, %arg1: memref<1x1xf32, #tpu.memory_space<smem>>, %arg2: memref<8x16xf32, #tpu.memory_space<vmem>>, %arg3: memref<8x1xi32, #tpu.memory_space<vmem>>, %arg4: memref<1x16xf32, #tpu.memory_space<vmem>>, %arg5: memref<8x1xf32, #tpu.memory_space<vmem>>) attributes {dimension_semantics = [#tpu.dimension_semantics<parallel>], iteration_bounds = array<i64: 1>, scalar_prefetch = 0 : i64, scratch_operands = 0 : i64, tpu.core_type = #tpu.core_type<tc>, window_params = [{transform_indices = @transform_0, window_bounds = array<i64: 1, 1>}, {transform_indices = @transform_1, window_bounds = array<i64: 8, 16>}, {transform_indices = @transform_2, window_bounds = array<i64: 8, 1>}, {pipeline_mode = #tpu.pipeline_mode<synchronous>, transform_indices = @transform_3, window_bounds = array<i64: 1, 16>}, {transform_indices = @transform_4, window_bounds = array<i64: 8, 1>}]} {
    %c0 = arith.constant 0 : index
    %c0_0 = arith.constant 0 : index
    %0 = memref.load %arg1[%c0, %c0_0] : memref<1x1xf32, #tpu.memory_space<smem>>
    %c0_1 = arith.constant 0 : index
    %c0_2 = arith.constant 0 : index
    %1 = vector.load %arg2[%c0_1, %c0_2] : memref<8x16xf32, #tpu.memory_space<vmem>>, vector<8x16xf32>
    %2 = vector.broadcast %0 : f32 to vector<8x16xf32>
    %3 = arith.mulf %1, %2 : vector<8x16xf32>
    %c0_3 = arith.constant 0 : index
    %c0_4 = arith.constant 0 : index
    %4 = vector.load %arg3[%c0_3, %c0_4] : memref<8x1xi32, #tpu.memory_space<vmem>>, vector<8x1xi32>
    %c-100_i32 = arith.constant -100 : i32
    %5 = vector.broadcast %c-100_i32 : i32 to vector<8x1xi32>
    %6 = arith.cmpi ne, %4, %5 : vector<8x1xi32>
    %cst = arith.constant dense<0xFF800000> : vector<8xf32>
    %7 = vector.multi_reduction <maximumf>, %3, %cst [1] : vector<8x16xf32> to vector<8xf32>
    %8 = vector.shape_cast %7 : vector<8xf32> to vector<8x1xf32>
    %9 = vector.broadcast %8 : vector<8x1xf32> to vector<8x16xf32>
    %10 = arith.subf %3, %9 : vector<8x16xf32>
    %11 = math.exp %10 : vector<8x16xf32>
    %cst_5 = arith.constant dense<0.000000e+00> : vector<8xf32>
    %12 = vector.multi_reduction <add>, %11, %cst_5 [1] : vector<8x16xf32> to vector<8xf32>
    %13 = vector.shape_cast %12 : vector<8xf32> to vector<8x1xf32>
    %14 = math.log %13 : vector<8x1xf32>
    %15 = arith.addf %8, %14 : vector<8x1xf32>
    %16 = tpu.iota {dimensions = array<i32: 1>} : vector<8x16xi32>
    %17 = vector.broadcast %4 : vector<8x1xi32> to vector<8x16xi32>
    %18 = arith.cmpi eq, %16, %17 : vector<8x16xi32>
    %cst_6 = arith.constant 0.000000e+00 : f32
    %19 = vector.broadcast %cst_6 : f32 to vector<8x16xf32>
    %20 = arith.select %18, %3, %19 : vector<8x16xi1>, vector<8x16xf32>
    %cst_7 = arith.constant dense<0.000000e+00> : vector<8xf32>
    %21 = vector.multi_reduction <add>, %20, %cst_7 [1] : vector<8x16xf32> to vector<8xf32>
    %22 = vector.shape_cast %21 : vector<8xf32> to vector<8x1xf32>
    %23 = arith.subf %15, %22 : vector<8x1xf32>
    %c0_8 = arith.constant 0 : index
    %c0_9 = arith.constant 0 : index
    %24 = vector.load %arg4[%c0_8, %c0_9] : memref<1x16xf32, #tpu.memory_space<vmem>>, vector<1x16xf32>
    %cst_10 = arith.constant 0.000000e+00 : f32
    %25 = vector.shape_cast %24 : vector<1x16xf32> to vector<1x16xf32>
    %26 = vector.broadcast %25 : vector<1x16xf32> to vector<8x16xf32>
    %27 = vector.broadcast %cst_10 : f32 to vector<8x16xf32>
    %28 = arith.select %18, %26, %27 : vector<8x16xi1>, vector<8x16xf32>
    %cst_11 = arith.constant dense<0.000000e+00> : vector<8xf32>
    %29 = vector.multi_reduction <add>, %28, %cst_11 [1] : vector<8x16xf32> to vector<8xf32>
    %30 = vector.shape_cast %29 : vector<8xf32> to vector<8x1xf32>
    %31 = arith.mulf %30, %23 : vector<8x1xf32>
    %cst_12 = arith.constant 0.000000e+00 : f32
    %32 = vector.broadcast %cst_12 : f32 to vector<8x1xf32>
    %33 = arith.select %6, %31, %32 : vector<8x1xi1>, vector<8x1xf32>
    %c0_13 = arith.constant 0 : index
    %c0_14 = arith.constant 0 : index
    %34 = vector.load %arg5[%c0_13, %c0_14] : memref<8x1xf32, #tpu.memory_space<vmem>>, vector<8x1xf32>
    tpu.vector_store %arg5[%c0_13, %c0_14], %33 {strides = array<i32>} : memref<8x1xf32, #tpu.memory_space<vmem>>, vector<8x1xf32>,
    return
  }
  func.func @transform_0(%arg0: i32) -> (i32, i32) {
    %c0_i32 = arith.constant 0 : i32
    %c0_i32_0 = arith.constant 0 : i32
    %c0_i32_1 = arith.constant 0 : i32
    return %c0_i32, %c0_i32_0 : i32, i32
  }
  func.func @transform_1(%arg0: i32) -> (i32, i32) {
    %c0_i32 = arith.constant 0 : i32
    %c0_i32_0 = arith.constant 0 : i32
    return %arg0, %c0_i32 : i32, i32
  }
  func.func @transform_2(%arg0: i32) -> (i32, i32) {
    %c0_i32 = arith.constant 0 : i32
    %c0_i32_0 = arith.constant 0 : i32
    return %arg0, %c0_i32 : i32, i32
  }
  func.func @transform_3(%arg0: i32) -> (i32, i32) {
    %c0_i32 = arith.constant 0 : i32
    %c0_i32_0 = arith.constant 0 : i32
    %c0_i32_1 = arith.constant 0 : i32
    return %c0_i32, %c0_i32_0 : i32, i32
  }
  func.func @transform_4(%arg0: i32) -> (i32, i32) {
    %c0_i32 = arith.constant 0 : i32
    %c0_i32_0 = arith.constant 0 : i32
    return %arg0, %c0_i32 : i32, i32
  }
}

</mosaic_0001>

<llo_original>
// kernel: tpu_custom_call.1
$region0: #{tpu_custom_call.1}
  #allocation0 [shape = 'u32[]', space=smem, size = 0x4, offset = 0x4, fixed_abs, tag = 'smem constant byte address 0x4 - core index']
  #allocation1 [shape = 'u32[144,128]{1,0:T(1,128)}', space=vmem, size = 0x12000, scoped, tag = 'internal scratch']
  #allocation2 [shape = 'f32[1,1]{1,0:T(1,128)S(6)}', space=smem, size = 0x200, scoped, tag = 'scoped memory for tpu_custom_call.1']
  %s0 = inlined_call_operand.<no memory space> [shape: f32[1,1], index: 0, kind: input, shape index: {}]
  %s1 = inlined_call_operand.vmem [shape: f32[8,16], index: 1, kind: input, shape index: {}]
  %s2 = inlined_call_operand.vmem [shape: s32[8,1], index: 2, kind: input, shape index: {}]
  %s3 = inlined_call_operand.vmem [shape: f32[1,16], index: 3, kind: input, shape index: {}]
  %s4 = inlined_call_operand.vmem [shape: f32[8,1], index: 4, kind: output, shape index: {}]
  %s5 = sld [smem:[#allocation0]]
  $region26: #{tpu_custom_call.1} parent=0
    _
  %s7 = ssub.s32 1, %s5
  %s8 = scalar_select 0, %s7, %s5
  %9 = sst [smem:[#allocation2]] %s0
  // Predicated region
  $region2: #{tpu_custom_call.1} parent=0 // pred_check
    _
  $region3: #{tpu_custom_call.1} parent=0 // pred_check_branch
    %11 = sbr.rel (0) target = $region5
  $region4: #{tpu_custom_call.1} parent=0 // pred_region
    _
  $region5: #{tpu_custom_call.1} parent=0 // pred_fallthru
    _
  // Predicated region
  $region6: #{tpu_custom_call.1} parent=0 // pred_check
    _
  $region7: #{tpu_custom_call.1} parent=0 // pred_check_branch
    %13 = sbr.rel (0) target = $region9
  $region8: #{tpu_custom_call.1} parent=0 // pred_region
    _
  $region9: #{tpu_custom_call.1} parent=0 // pred_fallthru
    _
  // Predicated region
  $region10: #{tpu_custom_call.1} parent=0 // pred_check
    _
  $region11: #{tpu_custom_call.1} parent=0 // pred_check_branch
    %15 = sbr.rel (0) target = $region13
  $region12: #{tpu_custom_call.1} parent=0 // pred_region
    _
  $region13: #{tpu_custom_call.1} parent=0 // pred_fallthru
    _
  // Predicated region
  $region14: #{tpu_custom_call.1} parent=0 // pred_check
    _
  $region15: #{tpu_custom_call.1} parent=0 // pred_check_branch
    %17 = sbr.rel (0) target = $region17
  $region16: #{tpu_custom_call.1} parent=0 // pred_region
    _
  $region17: #{tpu_custom_call.1} parent=0 // pred_fallthru
    _
  %s18 = sld [smem:[#allocation2]]
  %v19 = vld [vmem:[%s1] sm:$0xff]
  %v20 = vstv %s18
  %v21 = vmul.f32 %v19, %v20
  %v22 = vld [vmem:[%s2] sm:$0xff]
  %vm23 = vcmp.ne.s32.totalorder %v22, 4294967196
  %vm24 = vcmask 130048
  %v25 = vsel %vm24, %v21, -inf
  %26 = vmax.xlane.f32.xlu0 %v25
  %v27 = vpop.xlane.xlu0 %26
  %v28 = vsub.f32 %v21, %v27
  %v29 = vmul.f32 %v28, 1.442695
  %v30 = vpow.pop %v29
  %v31 = vsel %vm24, %v30, 0.0
  %32 = vadd.xlane.f32.xlu0 %v31
  %v33 = vpop.xlane.xlu0 %32
  %v34 = vlog2.pop %v33
  %v35 = vmul.f32 %v34, 0.6931472
  %v36 = vadd.f32 %v27, %v35
  %v37 = vlaneseq
  %v38 = vand.u32 %v37, 127
  %39 = vset.pattern.permute.xlu0 0
  %40 = vperm.xlu0 %39, %v22
  %v41 = vpop.permute.xlu0 %40
  %vm42 = vcmp.eq.s32.totalorder %v38, %v41
  %v43 = vsel %vm42, %v21, 0.0
  %v44 = vsel %vm24, %v43, 0.0
  %45 = vadd.xlane.f32.xlu0 %v44
  %v46 = vpop.xlane.xlu0 %45
  %v47 = vsub.f32 %v36, %v46
  %v48 = vld [vmem:[%s3] sm:$0x1]
  %v50 = vlaneseq
  %v51 = vshrl.u32 %v50, 7
  %v52 = vsub.s32 0, %v51
  %v53 = vrot.slane %v48, %v52
  %v55 = vsel %vm42, %v53, 0.0
  %v56 = vsel %vm24, %v55, 0.0
  %57 = vadd.xlane.f32.xlu0 %v56
  %v58 = vpop.xlane.xlu0 %57
  %v59 = vmul.f32 %v58, %v47
  %v60 = vsel %vm23, %v59, 0.0
  %vm61 = vcmask 7168
  %62 = vst.msk [vmem:[%s4] sm:$0xff] %vm61, %v60
  // Predicated region
  $region18: #{tpu_custom_call.1} parent=0 // pred_check
    _
  $region19: #{tpu_custom_call.1} parent=0 // pred_check_branch
    %64 = sbr.rel (0) target = $region21
  $region20: #{tpu_custom_call.1} parent=0 // pred_region
    _
  $region21: #{tpu_custom_call.1} parent=0 // pred_fallthru
    _
  // Predicated region
  $region22: #{tpu_custom_call.1} parent=0 // pred_check
    _
  $region23: #{tpu_custom_call.1} parent=0 // pred_check_branch
    %66 = sbr.rel (0) target = $region25
  $region24: #{tpu_custom_call.1} parent=0 // pred_region
    _
  $region25: #{tpu_custom_call.1} parent=0 // pred_fallthru
    _

</llo_original>
